<compile_context>
chip_gen: v5e
topology: v5e:2x2
jax: 0.10.0
libtpu: 0.0.40
codegen_flags: <defaults>
</compile_context>

<pallas_src>
import jax
import jax.numpy as jnp
from jax import lax
from jax.experimental import pallas as pl
from jax.experimental.pallas import tpu as pltpu

OBS_DIM = 5
ACT_DIM = 1
H_A = 200                 # actor hidden
H_C = 100                 # critic hidden
H_TOT = H_A + H_C         # fused hidden width (300)
OUT_W = 128               # lane-dense output slab width
MAX_BATCH_BLOCK = 512     # batch tile cap (fits v7x's smaller VMEM with margin)


def actor_critic_kernel(x_ref, w_in_ref, b_in_ref, w_head_ref, b_head_ref, out_ref):
    x = x_ref[...]                       # (BB, OBS_DIM)
    w_in = w_in_ref[...]                 # (OBS_DIM, H_TOT)
    bb = x.shape[0]

    # ---- fused first layer: K=5 contraction on the VPU (5 broadcast FMAs) ----
    h_pre = jnp.broadcast_to(b_in_ref[...], (bb, H_TOT))
    for k in range(OBS_DIM):             # static unroll
        h_pre = h_pre + x[:, k:k + 1] * w_in[k:k + 1, :]
    h = jnp.clip(h_pre, 0.0, 6.0)        # relu6, valid for both a1 and c1 halves

    # ---- fused head: one K=300 MXU matmul produces mu|std|value columns ----
    head = jnp.dot(h, w_head_ref[...], preferred_element_type=jnp.float32)
    head = head + b_head_ref[...]        # (BB, OUT_W); cols >= 3 are exactly 0

    # column-wise activations, then one unmasked lane-dense store
    col = lax.broadcasted_iota(jnp.int32, head.shape, 1)
    mu_v = 2.0 * jnp.tanh(head)
    std_v = jnp.logaddexp(head, 0.0) + 0.001     # softplus + 0.001
    out_ref[...] = jnp.where(col == 0, mu_v, jnp.where(col == 1, std_v, head))


def pack_params(p):
    """Pack the 10 per-layer tensors into 4 TPU-friendly buffers (host-side, once)."""
    w_in = jnp.concatenate([p["wa1"], p["wc1"]], axis=1)        # (5, 300)
    b_in = jnp.concatenate([p["ba1"], p["bc1"]], axis=1)        # (1, 300)

    w_head = jnp.zeros((H_TOT, OUT_W), jnp.float32)
    w_head = w_head.at[:H_A, 0].set(p["wmu"][:, 0])             # a1 -> mu
    w_head = w_head.at[:H_A, 1].set(p["wstd"][:, 0])            # a1 -> std
    w_head = w_head.at[H_A:, 2].set(p["wv"][:, 0])              # c1 -> value

    b_head = jnp.zeros((1, OUT_W), jnp.float32)
    b_head = b_head.at[0, 0].set(p["bmu"][0, 0])
    b_head = b_head.at[0, 1].set(p["bstd"][0, 0])
    b_head = b_head.at[0, 2].set(p["bv"][0, 0])
    return w_in, b_in, w_head, b_head


def actor_critic_forward(x, packed):
    """x: (B, OBS_DIM) f32; packed = pack_params(params). Returns (mu, std, values)."""
    w_in, b_in, w_head, b_head = packed
    B = x.shape[0]

    if B <= MAX_BATCH_BLOCK:
        bb = B
    else:
        bb = MAX_BATCH_BLOCK
        assert B % bb == 0, "batch must be a multiple of 512 when tiled"
    grid = (B // bb,)

    out = pl.pallas_call(
        actor_critic_kernel,
        out_shape=jax.ShapeDtypeStruct((B, OUT_W), jnp.float32),
        grid_spec=pltpu.PrefetchScalarGridSpec(
            num_scalar_prefetch=0,
            grid=grid,
            in_specs=[
                pl.BlockSpec((bb, OBS_DIM), lambda i: (i, 0)),
                pl.BlockSpec((OBS_DIM, H_TOT), lambda i: (0, 0)),
                pl.BlockSpec((1, H_TOT), lambda i: (0, 0)),
                pl.BlockSpec((H_TOT, OUT_W), lambda i: (0, 0)),
                pl.BlockSpec((1, OUT_W), lambda i: (0, 0)),
            ],
            out_specs=pl.BlockSpec((bb, OUT_W), lambda i: (i, 0)),
        ),
        compiler_params=pltpu.CompilerParams(
            dimension_semantics=("parallel",)),
    )(x, w_in, b_in, w_head, b_head)

    mu = out[:, 0:ACT_DIM]
    std = out[:, ACT_DIM:2 * ACT_DIM]
    values = out[:, 2 * ACT_DIM:2 * ACT_DIM + 1]
    return mu, std, values


def init_params(key):
    """Deterministic PyTorch-Linear-style uniform init: U(-1/sqrt(fan_in), +)."""
    def linear(key, fan_in, fan_out):
        kw, kb = jax.random.split(key)
        bound = 1.0 / jnp.sqrt(fan_in)
        w = jax.random.uniform(kw, (fan_in, fan_out), jnp.float32, -bound, bound)
        b = jax.random.uniform(kb, (1, fan_out), jnp.float32, -bound, bound)
        return w, b

    k1, k2, k3, k4, k5 = jax.random.split(key, 5)
    wa1, ba1 = linear(k1, OBS_DIM, H_A)
    wmu, bmu = linear(k2, H_A, ACT_DIM)
    wstd, bstd = linear(k3, H_A, ACT_DIM)
    wc1, bc1 = linear(k4, OBS_DIM, H_C)
    wv, bv = linear(k5, H_C, 1)
    return {
        "wa1": wa1, "ba1": ba1,
        "wmu": wmu, "bmu": bmu,
        "wstd": wstd, "bstd": bstd,
        "wc1": wc1, "bc1": bc1,
        "wv": wv, "bv": bv,
    }


def reference_forward(x, p):
    a1 = jnp.clip(x @ p["wa1"] + p["ba1"], 0.0, 6.0)
    mu = 2.0 * jnp.tanh(a1 @ p["wmu"] + p["bmu"])
    std = jnp.logaddexp(a1 @ p["wstd"] + p["bstd"], 0.0) + 0.001
    c1 = jnp.clip(x @ p["wc1"] + p["bc1"], 0.0, 6.0)
    values = c1 @ p["wv"] + p["bv"]
    return mu, std, values


# TODO(synk): loss_func / Normal log-prob / Adam update are training-side ops,
# not part of the module's forward; they are intentionally not translated.

if __name__ == "__main__":
    key = jax.random.PRNGKey(0)
    kx, kp = jax.random.split(key)

    B = 8
    x = jax.random.normal(kx, (B, OBS_DIM), jnp.float32)
    params = init_params(kp)
    packed = pack_params(params)

    mu, std, values = actor_critic_forward(x, packed)
    jax.block_until_ready((mu, std, values))

    # correctness check vs plain-JAX reference
    mu_r, std_r, val_r = reference_forward(x, params)
    assert mu.shape == (B, ACT_DIM) and std.shape == (B, ACT_DIM) and values.shape == (B, 1)
    assert jnp.allclose(mu, mu_r, atol=1e-5)
    assert jnp.allclose(std, std_r, atol=1e-5)
    assert jnp.allclose(values, val_r, atol=1e-5)

    print("KERNEL_OK")
</pallas_src>

<mosaic_0001>
module attributes {stable_mosaic.version = 11 : i64} {
  func.func @actor_critic_kernel(%arg0: i32, %arg1: memref<8x5xf32, #tpu.memory_space<vmem>>, %arg2: memref<5x300xf32, #tpu.memory_space<vmem>>, %arg3: memref<1x300xf32, #tpu.memory_space<vmem>>, %arg4: memref<300x128xf32, #tpu.memory_space<vmem>>, %arg5: memref<1x128xf32, #tpu.memory_space<vmem>>, %arg6: memref<8x128xf32, #tpu.memory_space<vmem>>) attributes {dimension_semantics = [#tpu.dimension_semantics<parallel>], iteration_bounds = array<i64: 1>, scalar_prefetch = 0 : i64, scratch_operands = 0 : i64, tpu.core_type = #tpu.core_type<tc>, window_params = [{transform_indices = @transform_0, window_bounds = array<i64: 8, 5>}, {pipeline_mode = #tpu.pipeline_mode<synchronous>, transform_indices = @transform_1, window_bounds = array<i64: 5, 300>}, {pipeline_mode = #tpu.pipeline_mode<synchronous>, transform_indices = @transform_2, window_bounds = array<i64: 1, 300>}, {pipeline_mode = #tpu.pipeline_mode<synchronous>, transform_indices = @transform_3, window_bounds = array<i64: 300, 128>}, {pipeline_mode = #tpu.pipeline_mode<synchronous>, transform_indices = @transform_4, window_bounds = array<i64: 1, 128>}, {transform_indices = @transform_5, window_bounds = array<i64: 8, 128>}]} {
    %c0 = arith.constant 0 : index
    %c0_0 = arith.constant 0 : index
    %0 = vector.load %arg1[%c0, %c0_0] : memref<8x5xf32, #tpu.memory_space<vmem>>, vector<8x5xf32>
    %c0_1 = arith.constant 0 : index
    %c0_2 = arith.constant 0 : index
    %1 = vector.load %arg2[%c0_1, %c0_2] : memref<5x300xf32, #tpu.memory_space<vmem>>, vector<5x300xf32>
    %c0_3 = arith.constant 0 : index
    %c0_4 = arith.constant 0 : index
    %2 = vector.load %arg3[%c0_3, %c0_4] : memref<1x300xf32, #tpu.memory_space<vmem>>, vector<1x300xf32>
    %3 = vector.shape_cast %2 : vector<1x300xf32> to vector<1x300xf32>
    %4 = vector.broadcast %3 : vector<1x300xf32> to vector<8x300xf32>
    %5 = vector.extract_strided_slice %0 {offsets = [0, 0], sizes = [8, 1], strides = [1, 1]} : vector<8x5xf32> to vector<8x1xf32>
    %6 = vector.extract_strided_slice %1 {offsets = [0, 0], sizes = [1, 300], strides = [1, 1]} : vector<5x300xf32> to vector<1x300xf32>
    %7 = vector.broadcast %5 : vector<8x1xf32> to vector<8x300xf32>
    %8 = vector.broadcast %6 : vector<1x300xf32> to vector<8x300xf32>
    %9 = arith.mulf %7, %8 : vector<8x300xf32>
    %10 = arith.addf %4, %9 : vector<8x300xf32>
    %11 = vector.extract_strided_slice %0 {offsets = [0, 1], sizes = [8, 1], strides = [1, 1]} : vector<8x5xf32> to vector<8x1xf32>
    %12 = vector.extract_strided_slice %1 {offsets = [1, 0], sizes = [1, 300], strides = [1, 1]} : vector<5x300xf32> to vector<1x300xf32>
    %13 = vector.broadcast %11 : vector<8x1xf32> to vector<8x300xf32>
    %14 = vector.broadcast %12 : vector<1x300xf32> to vector<8x300xf32>
    %15 = arith.mulf %13, %14 : vector<8x300xf32>
    %16 = arith.addf %10, %15 : vector<8x300xf32>
    %17 = vector.extract_strided_slice %0 {offsets = [0, 2], sizes = [8, 1], strides = [1, 1]} : vector<8x5xf32> to vector<8x1xf32>
    %18 = vector.extract_strided_slice %1 {offsets = [2, 0], sizes = [1, 300], strides = [1, 1]} : vector<5x300xf32> to vector<1x300xf32>
    %19 = vector.broadcast %17 : vector<8x1xf32> to vector<8x300xf32>
    %20 = vector.broadcast %18 : vector<1x300xf32> to vector<8x300xf32>
    %21 = arith.mulf %19, %20 : vector<8x300xf32>
    %22 = arith.addf %16, %21 : vector<8x300xf32>
    %23 = vector.extract_strided_slice %0 {offsets = [0, 3], sizes = [8, 1], strides = [1, 1]} : vector<8x5xf32> to vector<8x1xf32>
    %24 = vector.extract_strided_slice %1 {offsets = [3, 0], sizes = [1, 300], strides = [1, 1]} : vector<5x300xf32> to vector<1x300xf32>
    %25 = vector.broadcast %23 : vector<8x1xf32> to vector<8x300xf32>
    %26 = vector.broadcast %24 : vector<1x300xf32> to vector<8x300xf32>
    %27 = arith.mulf %25, %26 : vector<8x300xf32>
    %28 = arith.addf %22, %27 : vector<8x300xf32>
    %29 = vector.extract_strided_slice %0 {offsets = [0, 4], sizes = [8, 1], strides = [1, 1]} : vector<8x5xf32> to vector<8x1xf32>
    %30 = vector.extract_strided_slice %1 {offsets = [4, 0], sizes = [1, 300], strides = [1, 1]} : vector<5x300xf32> to vector<1x300xf32>
    %31 = vector.broadcast %29 : vector<8x1xf32> to vector<8x300xf32>
    %32 = vector.broadcast %30 : vector<1x300xf32> to vector<8x300xf32>
    %33 = arith.mulf %31, %32 : vector<8x300xf32>
    %34 = arith.addf %28, %33 : vector<8x300xf32>
    %cst = arith.constant 0.000000e+00 : f32
    %cst_5 = arith.constant 6.000000e+00 : f32
    %35 = vector.broadcast %cst : f32 to vector<8x300xf32>
    %36 = arith.maximumf %35, %34 : vector<8x300xf32>
    %37 = vector.broadcast %cst_5 : f32 to vector<8x300xf32>
    %38 = arith.minimumf %37, %36 : vector<8x300xf32>
    %c0_6 = arith.constant 0 : index
    %c0_7 = arith.constant 0 : index
    %39 = vector.load %arg4[%c0_6, %c0_7] : memref<300x128xf32, #tpu.memory_space<vmem>>, vector<300x128xf32>
    %cst_8 = arith.constant dense<0.000000e+00> : vector<8x128xf32>
    %40 = tpu.matmul %38, %39, %cst_8 {dimension_numbers = #tpu.dot_dimension_numbers<[1], [0], [0], [1], [0, 0, 1, 1], [], []>} : vector<8x300xf32>, vector<300x128xf32>, vector<8x128xf32> -> vector<8x128xf32>
    %c0_9 = arith.constant 0 : index
    %c0_10 = arith.constant 0 : index
    %41 = vector.load %arg5[%c0_9, %c0_10] : memref<1x128xf32, #tpu.memory_space<vmem>>, vector<1x128xf32>
    %42 = vector.broadcast %41 : vector<1x128xf32> to vector<8x128xf32>
    %43 = arith.addf %40, %42 : vector<8x128xf32>
    %44 = tpu.iota {dimensions = array<i32: 1>} : vector<8x128xi32>
    %45 = math.tanh %43 : vector<8x128xf32>
    %cst_11 = arith.constant 2.000000e+00 : f32
    %46 = vector.broadcast %cst_11 : f32 to vector<8x128xf32>
    %47 = arith.mulf %46, %45 : vector<8x128xf32>
    %cst_12 = arith.constant 0.000000e+00 : f32
    %48 = vector.broadcast %cst_12 : f32 to vector<8x128xf32>
    %49 = arith.maximumf %43, %48 : vector<8x128xf32>
    %50 = vector.broadcast %cst_12 : f32 to vector<8x128xf32>
    %51 = arith.subf %43, %50 : vector<8x128xf32>
    %52 = arith.cmpf one, %51, %51 : vector<8x128xf32>
    %53 = vector.broadcast %cst_12 : f32 to vector<8x128xf32>
    %54 = arith.addf %43, %53 : vector<8x128xf32>
    %55 = math.absf %51 : vector<8x128xf32>
    %cst_13 = arith.constant 0.000000e+00 : f32
    %56 = vector.broadcast %cst_13 : f32 to vector<8x128xf32>
    %57 = arith.subf %56, %55 : vector<8x128xf32>
    %58 = math.exp %57 : vector<8x128xf32>
    %59 = math.log1p %58 : vector<8x128xf32>
    %60 = arith.addf %49, %59 : vector<8x128xf32>
    %61 = arith.select %52, %54, %60 : vector<8x128xi1>, vector<8x128xf32>
    %cst_14 = arith.constant 1.000000e-03 : f32
    %62 = vector.broadcast %cst_14 : f32 to vector<8x128xf32>
    %63 = arith.addf %61, %62 : vector<8x128xf32>
    %c0_i32 = arith.constant 0 : i32
    %64 = vector.broadcast %c0_i32 : i32 to vector<8x128xi32>
    %65 = arith.cmpi eq, %44, %64 : vector<8x128xi32>
    %c1_i32 = arith.constant 1 : i32
    %66 = vector.broadcast %c1_i32 : i32 to vector<8x128xi32>
    %67 = arith.cmpi eq, %44, %66 : vector<8x128xi32>
    %68 = arith.select %67, %63, %43 : vector<8x128xi1>, vector<8x128xf32>
    %69 = arith.select %65, %47, %68 : vector<8x128xi1>, vector<8x128xf32>
    %c0_15 = arith.constant 0 : index
    %c0_16 = arith.constant 0 : index
    %70 = vector.load %arg6[%c0_15, %c0_16] : memref<8x128xf32, #tpu.memory_space<vmem>>, vector<8x128xf32>
    tpu.vector_store %arg6[%c0_15, %c0_16], %69 {strides = array<i32>} : memref<8x128xf32, #tpu.memory_space<vmem>>, vector<8x128xf32>,
    return
  }
  func.func @transform_0(%arg0: i32) -> (i32, i32) {
    %c0_i32 = arith.constant 0 : i32
    %c0_i32_0 = arith.constant 0 : i32
    return %arg0, %c0_i32 : i32, i32
  }
  func.func @transform_1(%arg0: i32) -> (i32, i32) {
    %c0_i32 = arith.constant 0 : i32
    %c0_i32_0 = arith.constant 0 : i32
    %c0_i32_1 = arith.constant 0 : i32
    return %c0_i32, %c0_i32_0 : i32, i32
  }
  func.func @transform_2(%arg0: i32) -> (i32, i32) {
    %c0_i32 = arith.constant 0 : i32
    %c0_i32_0 = arith.constant 0 : i32
    %c0_i32_1 = arith.constant 0 : i32
    return %c0_i32, %c0_i32_0 : i32, i32
  }
  func.func @transform_3(%arg0: i32) -> (i32, i32) {
    %c0_i32 = arith.constant 0 : i32
    %c0_i32_0 = arith.constant 0 : i32
    %c0_i32_1 = arith.constant 0 : i32
    return %c0_i32, %c0_i32_0 : i32, i32
  }
  func.func @transform_4(%arg0: i32) -> (i32, i32) {
    %c0_i32 = arith.constant 0 : i32
    %c0_i32_0 = arith.constant 0 : i32
    %c0_i32_1 = arith.constant 0 : i32
    return %c0_i32, %c0_i32_0 : i32, i32
  }
  func.func @transform_5(%arg0: i32) -> (i32, i32) {
    %c0_i32 = arith.constant 0 : i32
    %c0_i32_0 = arith.constant 0 : i32
    return %arg0, %c0_i32 : i32, i32
  }
}

</mosaic_0001>

<llo_original>
// kernel: tpu_custom_call.1
$region0: #{tpu_custom_call.1}
  #allocation0 [shape = 'u32[]', space=smem, size = 0x4, offset = 0x4, fixed_abs, tag = 'smem constant byte address 0x4 - core index']
  #allocation1 [shape = 'u32[72,128]{1,0:T(1,128)}', space=vmem, size = 0x9000, scoped, tag = 'internal scratch']
  %s0 = inlined_call_operand.hbm [shape: f32[8,5], index: 0, kind: input, shape index: {}]
  %s1 = inlined_call_operand.hbm [shape: f32[5,300], index: 1, kind: input, shape index: {}]
  %s2 = inlined_call_operand.hbm [shape: f32[1,300], index: 2, kind: input, shape index: {}]
  %s3 = inlined_call_operand.hbm [shape: f32[300,128], index: 3, kind: input, shape index: {}]
  %s4 = inlined_call_operand.vmem [shape: f32[1,128], index: 4, kind: input, shape index: {}]
  %s5 = inlined_call_operand.hbm [shape: f32[8,128], index: 5, kind: output, shape index: {}]
  %s6 = sld [smem:[#allocation0]]
  $region46: #{tpu_custom_call.1} parent=0
    _
  %s8 = ssub.s32 1, %s6
  %s9 = scalar_select 0, %s8, %s6
  $region1: #{tpu_custom_call.1} parent=0
    #allocation2 [shape = 'u8[4096]{0}', space=vmem, size = 0x1000, scoped, tag = 'input window, operand 0, single buffered']
    #allocation3 [shape = 's32[1]{0}', space=sflag, size = 0x4, scoped, tag = 'scoped memory for tpu_custom_call.1']
    #allocation4 [shape = 's32[1]{0}', space=sflag, size = 0x4, scoped, tag = 'scoped memory for tpu_custom_call.1']
    #allocation5 [shape = 'u8[12288]{0}', space=vmem, size = 0x3000, scoped, tag = 'input window, operand 1, single buffered']
    #allocation6 [shape = 's32[1]{0}', space=sflag, size = 0x4, scoped, tag = 'scoped memory for tpu_custom_call.1']
    #allocation7 [shape = 'u8[1536]{0}', space=vmem, size = 0x800, scoped, tag = 'input window, operand 2, single buffered']
    #allocation8 [shape = 'u8[155648]{0}', space=vmem, size = 0x26000, scoped, tag = 'input window, operand 3, single buffered']
    #allocation9 [shape = 's32[1]{0}', space=sflag, size = 0x4, scoped, tag = 'scoped memory for tpu_custom_call.1']
    #allocation10 [shape = 'u8[4096]{0}', space=vmem, size = 0x1000, scoped, tag = 'output window, operand 0, single buffered']
    %10 = vsyncpa [#allocation3], 0
    %11 = vsyncpa [#allocation6], 0
    %12 = vsyncpa [#allocation9], 0
    %13 = vsyncpa [#allocation4], 0
    // Predicated region
    $region2: #{tpu_custom_call.1} parent=1 // pred_check
      _
    $region3: #{tpu_custom_call.1} parent=1 // pred_check_branch
      %15 = sbr.rel (0) target = $region5
    $region4: #{tpu_custom_call.1} parent=1 // pred_region
      %17 = vsyncadd [#allocation3], 0
      %s19 = sshll.u32 %s0, 4
      %s20 = int_to_ptr.hbm [resolvable:$true] %s19
      %s21 = sshll.u32 [#allocation2], 4
      %s22 = int_to_ptr.vmem [resolvable:$true] %s21
      %24 = dma.hbm_to_vmem [thread:$0]  %s20, 128, %s22, [#allocation3]
    $region5: #{tpu_custom_call.1} parent=1 // pred_fallthru
      _
    // Predicated region
    $region6: #{tpu_custom_call.1} parent=1 // pred_check
      _
    $region7: #{tpu_custom_call.1} parent=1 // pred_check_branch
      %26 = sbr.rel (0) target = $region9
    $region8: #{tpu_custom_call.1} parent=1 // pred_region
      %28 = vsyncadd [#allocation6], 0
      %s30 = sshll.u32 %s1, 4
      %s31 = int_to_ptr.hbm [resolvable:$true] %s30
      %s32 = sshll.u32 [#allocation5], 4
      %s33 = int_to_ptr.vmem [resolvable:$true] %s32
      %35 = dma.hbm_to_vmem [thread:$0]  %s31, 384, %s33, [#allocation6]
    $region9: #{tpu_custom_call.1} parent=1 // pred_fallthru
      _
    // Predicated region
    $region10: #{tpu_custom_call.1} parent=1 // pred_check
      _
    $region11: #{tpu_custom_call.1} parent=1 // pred_check_branch
      %37 = sbr.rel (0) target = $region13
    $region12: #{tpu_custom_call.1} parent=1 // pred_region
      %39 = vsyncadd [#allocation6], 0
      %s41 = sshll.u32 %s2, 4
      %s42 = int_to_ptr.hbm [resolvable:$true] %s41
      %s43 = sshll.u32 [#allocation7], 4
      %s44 = int_to_ptr.vmem [resolvable:$true] %s43
      %46 = dma.hbm_to_vmem [thread:$0]  %s42, 48, %s44, [#allocation6]
    $region13: #{tpu_custom_call.1} parent=1 // pred_fallthru
      _
    // Predicated region
    $region14: #{tpu_custom_call.1} parent=1 // pred_check
      _
    $region15: #{tpu_custom_call.1} parent=1 // pred_check_branch
      %48 = sbr.rel (0) target = $region17
    $region16: #{tpu_custom_call.1} parent=1 // pred_region
      %50 = vsyncadd [#allocation9], 0
      %s51 = sshll.u32 %s3, 4
      %s52 = int_to_ptr.hbm [resolvable:$true] %s51
      %s53 = sshll.u32 [#allocation8], 4
      %s54 = int_to_ptr.vmem [resolvable:$true] %s53
      %59 = dma.hbm_to_vmem [thread:$0]  %s52, 4864, %s54, [#allocation9], 128, 128, 8
    $region17: #{tpu_custom_call.1} parent=1 // pred_fallthru
      _
    // Predicated region
    $region18: #{tpu_custom_call.1} parent=1 // pred_check
      _
    $region19: #{tpu_custom_call.1} parent=1 // pred_check_branch
      %61 = sbr.rel (0) target = $region21
    $region20: #{tpu_custom_call.1} parent=1 // pred_region
      _
    $region21: #{tpu_custom_call.1} parent=1 // pred_fallthru
      _
    // Predicated region
    $region22: #{tpu_custom_call.1} parent=1 // pred_check
      _
    $region23: #{tpu_custom_call.1} parent=1 // pred_check_branch
      %63 = sbr.rel (0) target = $region25
    $region24: #{tpu_custom_call.1} parent=1 // pred_region
      %65 = dma.done [#allocation3], 128
    $region25: #{tpu_custom_call.1} parent=1 // pred_fallthru
      _
    // Predicated region
    $region26: #{tpu_custom_call.1} parent=1 // pred_check
      _
    $region27: #{tpu_custom_call.1} parent=1 // pred_check_branch
      %67 = sbr.rel (0) target = $region29
    $region28: #{tpu_custom_call.1} parent=1 // pred_region
      %69 = dma.done [#allocation6], 384
    $region29: #{tpu_custom_call.1} parent=1 // pred_fallthru
      _
    // Predicated region
    $region30: #{tpu_custom_call.1} parent=1 // pred_check
      _
    $region31: #{tpu_custom_call.1} parent=1 // pred_check_branch
      %71 = sbr.rel (0) target = $region33
    $region32: #{tpu_custom_call.1} parent=1 // pred_region
      %73 = dma.done [#allocation6], 48
    $region33: #{tpu_custom_call.1} parent=1 // pred_fallthru
      _
    // Predicated region
    $region34: #{tpu_custom_call.1} parent=1 // pred_check
      _
    $region35: #{tpu_custom_call.1} parent=1 // pred_check_branch
      %75 = sbr.rel (0) target = $region37
    $region36: #{tpu_custom_call.1} parent=1 // pred_region
      %77 = dma.done [#allocation9], 4864
    $region37: #{tpu_custom_call.1} parent=1 // pred_fallthru
      _
    %v78 = vld [vmem:[#allocation2] sm:$0xff]
    %v79 = vld [vmem:[#allocation5] sm:$0x1f]
    %v80 = vld [vmem:[#allocation5 + $0x8] sm:$0x1f]
    %v81 = vld [vmem:[#allocation5 + $0x10] sm:$0x1f]
    %v82 = vld [vmem:[#allocation7] sm:$0x7]
    %v84 = vperm.slane %v82, 0
    %v85 = vperm.slane %v82, 1
    %v86 = vperm.slane %v82, 2
    %91 = vset.pattern.permute.xlu0 0
    %92 = vperm.xlu0 %91, %v78
    %v93 = vpop.permute.xlu0 %92
    %v95 = vperm.slane %v79, 0
    %v96 = vperm.slane %v80, 0
    %v97 = vperm.slane %v81, 0
    %v98 = vmul.f32 %v93, %v95
    %v99 = vmul.f32 %v93, %v96
    %v100 = vmul.f32 %v93, %v97
    %v101 = vadd.f32 %v84, %v98
    %v102 = vadd.f32 %v85, %v99
    %v103 = vadd.f32 %v86, %v100
    %104 = vset.pattern.permute.xlu0 1
    %105 = vperm.xlu0 %104, %v78
    %v106 = vpop.permute.xlu0 %105
    %v108 = vperm.slane %v79, 1
    %v109 = vperm.slane %v80, 1
    %v110 = vperm.slane %v81, 1
    %v111 = vmul.f32 %v106, %v108
    %v112 = vmul.f32 %v106, %v109
    %v113 = vmul.f32 %v106, %v110
    %v114 = vadd.f32 %v101, %v111
    %v115 = vadd.f32 %v102, %v112
    %v116 = vadd.f32 %v103, %v113
    %117 = vset.pattern.permute.xlu0 2
    %118 = vperm.xlu0 %117, %v78
    %v119 = vpop.permute.xlu0 %118
    %v121 = vperm.slane %v79, 2
    %v122 = vperm.slane %v80, 2
    %v123 = vperm.slane %v81, 2
    %v124 = vmul.f32 %v119, %v121
    %v125 = vmul.f32 %v119, %v122
    %v126 = vmul.f32 %v119, %v123
    %v127 = vadd.f32 %v114, %v124
    %v128 = vadd.f32 %v115, %v125
    %v129 = vadd.f32 %v116, %v126
    %130 = vset.pattern.permute.xlu0 3
    %131 = vperm.xlu0 %130, %v78
    %v132 = vpop.permute.xlu0 %131
    %v134 = vperm.slane %v79, 3
    %v135 = vperm.slane %v80, 3
    %v136 = vperm.slane %v81, 3
    %v137 = vmul.f32 %v132, %v134
    %v138 = vmul.f32 %v132, %v135
    %v139 = vmul.f32 %v132, %v136
    %v140 = vadd.f32 %v127, %v137
    %v141 = vadd.f32 %v128, %v138
    %v142 = vadd.f32 %v129, %v139
    %143 = vset.pattern.permute.xlu0 4
    %144 = vperm.xlu0 %143, %v78
    %v145 = vpop.permute.xlu0 %144
    %v147 = vperm.slane %v79, 4
    %v148 = vperm.slane %v80, 4
    %v149 = vperm.slane %v81, 4
    %v150 = vmul.f32 %v145, %v147
    %v151 = vmul.f32 %v145, %v148
    %v152 = vmul.f32 %v145, %v149
    %v153 = vadd.f32 %v140, %v150
    %v154 = vadd.f32 %v141, %v151
    %v155 = vadd.f32 %v142, %v152
    %v156 = vmax.f32 %v153, 0.0
    %v157 = vmax.f32 %v154, 0.0
    %v158 = vmax.f32 %v155, 0.0
    %v159 = vmin.f32 %v156, 6.0
    %v160 = vmin.f32 %v157, 6.0
    %v161 = vmin.f32 %v158, 6.0
    %v162 = vld [vmem:[#allocation8] sm:$0xff]
    %v163 = vld [vmem:[#allocation8 + $0x8] sm:$0xff]
    %v164 = vld [vmem:[#allocation8 + $0x10] sm:$0xff]
    %v165 = vld [vmem:[#allocation8 + $0x18] sm:$0xff]
    %v166 = vld [vmem:[#allocation8 + $0x20] sm:$0xff]
    %v167 = vld [vmem:[#allocation8 + $0x28] sm:$0xff]
    %v168 = vld [vmem:[#allocation8 + $0x30] sm:$0xff]
    %v169 = vld [vmem:[#allocation8 + $0x38] sm:$0xff]
    %v170 = vld [vmem:[#allocation8 + $0x40] sm:$0xff]
    %v171 = vld [vmem:[#allocation8 + $0x48] sm:$0xff]
    %v172 = vld [vmem:[#allocation8 + $0x50] sm:$0xff]
    %v173 = vld [vmem:[#allocation8 + $0x58] sm:$0xff]
    %v174 = vld [vmem:[#allocation8 + $0x60] sm:$0xff]
    %v175 = vld [vmem:[#allocation8 + $0x68] sm:$0xff]
    %v176 = vld [vmem:[#allocation8 + $0x70] sm:$0xff]
    %v177 = vld [vmem:[#allocation8 + $0x78] sm:$0xff]
    %v178 = vld [vmem:[#allocation8 + $0x80] sm:$0xff]
    %v179 = vld [vmem:[#allocation8 + $0x88] sm:$0xff]
    %v180 = vld [vmem:[#allocation8 + $0x90] sm:$0xff]
    %v181 = vld [vmem:[#allocation8 + $0x98] sm:$0xff]
    %v182 = vld [vmem:[#allocation8 + $0xa0] sm:$0xff]
    %v183 = vld [vmem:[#allocation8 + $0xa8] sm:$0xff]
    %v184 = vld [vmem:[#allocation8 + $0xb0] sm:$0xff]
    %v185 = vld [vmem:[#allocation8 + $0xb8] sm:$0xff]
    %v186 = vld [vmem:[#allocation8 + $0xc0] sm:$0xff]
    %v187 = vld [vmem:[#allocation8 + $0xc8] sm:$0xff]
    %v188 = vld [vmem:[#allocation8 + $0xd0] sm:$0xff]
    %v189 = vld [vmem:[#allocation8 + $0xd8] sm:$0xff]
    %v190 = vld [vmem:[#allocation8 + $0xe0] sm:$0xff]
    %v191 = vld [vmem:[#allocation8 + $0xe8] sm:$0xff]
    %v192 = vld [vmem:[#allocation8 + $0xf0] sm:$0xff]
    %v193 = vld [vmem:[#allocation8 + $0xf8] sm:$0xff]
    %v194 = vld [vmem:[#allocation8 + $0x100] sm:$0xff]
    %v195 = vld [vmem:[#allocation8 + $0x108] sm:$0xff]
    %v196 = vld [vmem:[#allocation8 + $0x110] sm:$0xff]
    %v197 = vld [vmem:[#allocation8 + $0x118] sm:$0xff]
    %v198 = vld [vmem:[#allocation8 + $0x120] sm:$0xff]
    %v199 = vld [vmem:[#allocation8 + $0x128] sm:$0xf]
    %v200 = vld [vmem:[%s4] sm:$0x1]
    %v202 = vperm.slane %v200, 0
    %vm204 = vcmask 359424
    %v206 = vsel %vm204, %v161, 0
    %vm208 = vcmask 1043456
    %v210 = vsel %vm208, %v199, 0
    %212 = vmatpush.msra.mxu0 %v177
    %213 = vmatpush.msra.mxu0 %v176
    %214 = vmatpush.msra.mxu0 %v175
    %215 = vmatpush.msra.mxu0 %v174
    %216 = vmatpush.msra.mxu0 %v173
    %217 = vmatpush.msra.mxu0 %v172
    %218 = vmatpush.msra.mxu0 %v171
    %219 = vmatpush.msra.mxu0 %v170
    %220 = vmatpush.msra.mxu0 %v169
    %221 = vmatpush.msra.mxu0 %v168
    %222 = vmatpush.msra.mxu0 %v167
    %223 = vmatpush.msra.mxu0 %v166
    %224 = vmatpush.msra.mxu0 %v165
    %225 = vmatpush.msra.mxu0 %v164
    %226 = vmatpush.msra.mxu0 %v163
    %227 = vmatpush.msra.mxu0 %v162
    %228 = vmatmul.f32.gmra.mxu0 %v159
    %v229 = vpop.f32.mrf.mxu0
    %v230 = vadd.f32 %v202, %v229
    %231 = vdwg.mxu0
    %232 = vmatpush.msra.mxu0 %v193
    %233 = vmatpush.msra.mxu0 %v192
    %234 = vmatpush.msra.mxu0 %v191
    %235 = vmatpush.msra.mxu0 %v190
    %236 = vmatpush.msra.mxu0 %v189
    %237 = vmatpush.msra.mxu0 %v188
    %238 = vmatpush.msra.mxu0 %v187
    %239 = vmatpush.msra.mxu0 %v186
    %240 = vmatpush.msra.mxu0 %v185
    %241 = vmatpush.msra.mxu0 %v184
    %242 = vmatpush.msra.mxu0 %v183
    %243 = vmatpush.msra.mxu0 %v182
    %244 = vmatpush.msra.mxu0 %v181
    %245 = vmatpush.msra.mxu0 %v180
    %246 = vmatpush.msra.mxu0 %v179
    %247 = vmatpush.msra.mxu0 %v178
    %248 = vmatmul.f32.gmra.mxu0 %v160
    %v249 = vpop.f32.mrf.mxu0
    %v250 = vadd.f32 %v230, %v249
    %251 = vdwg.mxu0
    %252 = vmatpush.msra.mxu0 0.0
    %253 = vmatpush.msra.mxu0 0.0
    %254 = vmatpush.msra.mxu0 0.0
    %255 = vmatpush.msra.mxu0 0.0
    %256 = vmatpush.msra.mxu0 0.0
    %257 = vmatpush.msra.mxu0 0.0
    %258 = vmatpush.msra.mxu0 0.0
    %259 = vmatpush.msra.mxu0 0.0
    %260 = vmatpush.msra.mxu0 0.0
    %261 = vmatpush.msra.mxu0 0.0
    %262 = vmatpush.msra.mxu0 %v210
    %263 = vmatpush.msra.mxu0 %v198
    %264 = vmatpush.msra.mxu0 %v197
    %265 = vmatpush.msra.mxu0 %v196
    %266 = vmatpush.msra.mxu0 %v195
    %267 = vmatpush.msra.mxu0 %v194
    %268 = vmatmul.f32.gmra.mxu0 %v206
    %v269 = vpop.f32.mrf.mxu0
    %v270 = vadd.f32 %v250, %v269
    %271 = vdwg.mxu0
    %v272 = vlaneseq
    %v273 = vand.u32 %v272, 127
    %v274 = vtanh.pop %v270
    %v275 = vmul.f32 %v274, 2.0
    %v276 = vmax.f32 %v270, 0.0
    %vm277 = vcmp.ne.f32.partialorder %v270, %v270
    %v278 = vadd.f32 %v270, 0.0
    %v279 = vand.u32 2147483647, %v270
    %v280 = vsub.f32 0.0, %v279
    %v281 = vmul.f32 %v280, 1.442695
    %v282 = vpow.pop %v281
    %v283 = vadd.f32 %v282, 1.0
    %v284 = vlog2.pop %v283
    %v285 = vmul.f32 %v284, 0.6931472
    %v286 = vmul.f32 -0.5, %v282
    %v287 = vadd.f32 %v286, 1.0
    %v288 = vmul.f32 %v287, %v282
    %v289 = vand.u32 2147483647, %v282
    %vm290 = vcmp.lt.f32.partialorder %v289, 0.0004427343
    %v291 = vsel %vm290, %v288, %v285
    %v292 = vadd.f32 %v276, %v291
    %v293 = vsel %vm277, %v278, %v292
    %v294 = vadd.f32 %v293, 0.001
    %vm295 = vcmp.eq.s32.totalorder %v273, 0
    %vm296 = vcmp.eq.s32.totalorder %v273, 1
    %v297 = vsel %vm296, %v294, %v270
    %v298 = vsel %vm295, %v275, %v297
    %299 = vst [vmem:[#allocation10] sm:$0xff] %v298
    // Predicated region
    $region38: #{tpu_custom_call.1} parent=1 // pred_check
      _
    $region39: #{tpu_custom_call.1} parent=1 // pred_check_branch
      %301 = sbr.rel (0) target = $region41
    $region40: #{tpu_custom_call.1} parent=1 // pred_region
      %303 = vsyncadd [#allocation4], 0
      %s305 = sshll.u32 [#allocation10], 4
      %s306 = int_to_ptr.vmem [resolvable:$true] %s305
      %s307 = sshll.u32 %s5, 4
      %s308 = int_to_ptr.hbm [resolvable:$true] %s307
      %310 = dma.vmem_to_hbm [thread:$0]  %s306, 128, %s308, [#allocation4]
    $region41: #{tpu_custom_call.1} parent=1 // pred_fallthru
      _
    // Predicated region
    $region42: #{tpu_custom_call.1} parent=1 // pred_check
      _
    $region43: #{tpu_custom_call.1} parent=1 // pred_check_branch
      %312 = sbr.rel (0) target = $region45
    $region44: #{tpu_custom_call.1} parent=1 // pred_region
      %314 = dma.done [#allocation4], 128
    $region45: #{tpu_custom_call.1} parent=1 // pred_fallthru
      _
    %315 = vsyncpa [#allocation3], 1
    %316 = vsyncpa [#allocation6], 1
    %317 = vsyncpa [#allocation9], 1
    %318 = vsyncpa [#allocation4], 1

</llo_original>
